<compile_context>
chip_gen: v5e
topology: v5e:2x2
jax: 0.10.0
libtpu: 0.0.40
codegen_flags: <defaults>
</compile_context>

<pallas_src>
import functools

import jax
import jax.numpy as jnp
from jax.experimental import pallas as pl
from jax.experimental.pallas import tpu as pltpu

LANE = 128


def _round_up(x, m):
    return ((x + m - 1) // m) * m


def mlp_kernel(x_ref, w1_ref, b1_ref, w2_ref, b2_ref, w3_ref, b3_ref, o_ref):
    # Layer 1: Linear + ReLU (f32 accumulation, f32 epilogue, cast back for MXU)
    h1 = jnp.dot(x_ref[...], w1_ref[...], preferred_element_type=jnp.float32)
    h1 = jnp.maximum(h1 + b1_ref[...], 0.0).astype(x_ref.dtype)
    # Layer 2: Linear + ReLU
    h2 = jnp.dot(h1, w2_ref[...], preferred_element_type=jnp.float32)
    h2 = jnp.maximum(h2 + b2_ref[...], 0.0).astype(x_ref.dtype)
    # Layer 3: Linear (no activation)
    out = jnp.dot(h2, w3_ref[...], preferred_element_type=jnp.float32)
    o_ref[...] = (out + b3_ref[...]).astype(o_ref.dtype)


@functools.partial(jax.jit, static_argnames=("tile_b", "compute_dtype"))
def nn_forward(x, w1, b1, w2, b2, w3, b3, *, tile_b=128,
               compute_dtype=jnp.bfloat16):
    B, i_s = x.shape
    h_s = w1.shape[1]
    n = w3.shape[1]

    # Lane-dense padded feature dims (multiples of 128).
    IP = _round_up(i_s, LANE)
    HP = _round_up(h_s, LANE)
    NP = _round_up(n, LANE)

    # Batch tile: multiple of 16 (bf16 sublane packing), capped at tile_b.
    tb = min(tile_b, _round_up(B, 16))
    BP = _round_up(B, tb)

    cd = compute_dtype
    xp = jnp.zeros((BP, IP), cd).at[:B, :i_s].set(x.astype(cd))
    w1p = jnp.zeros((IP, HP), cd).at[:i_s, :h_s].set(w1.astype(cd))
    w2p = jnp.zeros((HP, HP), cd).at[:h_s, :h_s].set(w2.astype(cd))
    w3p = jnp.zeros((HP, NP), cd).at[:h_s, :n].set(w3.astype(cd))
    b1p = jnp.zeros((1, HP), jnp.float32).at[:, :h_s].set(
        b1.reshape(1, h_s).astype(jnp.float32))
    b2p = jnp.zeros((1, HP), jnp.float32).at[:, :h_s].set(
        b2.reshape(1, h_s).astype(jnp.float32))
    b3p = jnp.zeros((1, NP), jnp.float32).at[:, :n].set(
        b3.reshape(1, n).astype(jnp.float32))

    grid = (BP // tb,)
    const = lambda i: (0, 0)   # weights/biases: same block every step -> stay resident

    out_padded = pl.pallas_call(
        mlp_kernel,
        out_shape=jax.ShapeDtypeStruct((BP, NP), x.dtype),
        grid_spec=pltpu.PrefetchScalarGridSpec(
            num_scalar_prefetch=0,
            grid=grid,
            in_specs=[
                pl.BlockSpec((tb, IP), lambda i: (i, 0)),   # x tile streams on B
                pl.BlockSpec((IP, HP), const),              # w1 resident
                pl.BlockSpec((1, HP), const),               # b1 resident
                pl.BlockSpec((HP, HP), const),              # w2 resident
                pl.BlockSpec((1, HP), const),               # b2 resident
                pl.BlockSpec((HP, NP), const),              # w3 resident
                pl.BlockSpec((1, NP), const),               # b3 resident
            ],
            out_specs=pl.BlockSpec((tb, NP), lambda i: (i, 0)),
        ),
        compiler_params=pltpu.CompilerParams(
            dimension_semantics=("parallel",),     # megacore-shard the batch axis
            vmem_limit_bytes=32 * 1024 * 1024,     # safe on v5e/v6e/v7x
        ),
    )(xp, w1p, b1p, w2p, b2p, w3p, b3p)

    return out_padded[:B, :n]


def init_linear_params(key, fan_in, fan_out, dtype=jnp.float32):
    """Deterministic init matching PyTorch nn.Linear default:
    U(-1/sqrt(fan_in), 1/sqrt(fan_in)). Weight returned as [in, out]
    (transposed vs. PyTorch's [out, in]), so y = x @ W + b."""
    kw, kb = jax.random.split(key)
    bound = 1.0 / jnp.sqrt(jnp.asarray(fan_in, dtype))
    w = jax.random.uniform(kw, (fan_in, fan_out), dtype, minval=-bound, maxval=bound)
    b = jax.random.uniform(kb, (1, fan_out), dtype, minval=-bound, maxval=bound)
    return w, b


if __name__ == "__main__":
    # Small shapes consistent with the module: batch=8, i_s=32, h_s=64, n=16
    B, i_s, h_s, n = 8, 32, 64, 16

    key = jax.random.PRNGKey(0)
    kx, k1, k2, k3 = jax.random.split(key, 4)

    x = jax.random.normal(kx, (B, i_s), jnp.float32)
    w1, b1 = init_linear_params(k1, i_s, h_s)
    w2, b2 = init_linear_params(k2, h_s, h_s)
    w3, b3 = init_linear_params(k3, h_s, n)

    # Reference in plain JAX (same semantics as the PyTorch forward)
    ref = jnp.maximum(x @ w1 + b1, 0.0)
    ref = jnp.maximum(ref @ w2 + b2, 0.0)
    ref = ref @ w3 + b3

    # f32 compute path: tight correctness check.
    out_f32 = jax.block_until_ready(
        nn_forward(x, w1, b1, w2, b2, w3, b3, compute_dtype=jnp.float32))
    assert out_f32.shape == (B, n)
    assert jnp.allclose(out_f32, ref, atol=1e-5, rtol=1e-5)

    # bf16 compute path (default, MXU-native on v6e/v7x): looser check.
    out_bf16 = jax.block_until_ready(nn_forward(x, w1, b1, w2, b2, w3, b3))
    assert out_bf16.shape == (B, n)
    assert jnp.allclose(out_bf16, ref, atol=5e-2, rtol=5e-2)

    print("KERNEL_OK")
</pallas_src>

<mosaic_0001>
module attributes {stable_mosaic.version = 11 : i64} {
  func.func @mlp_kernel(%arg0: i32, %arg1: memref<16x128xf32, #tpu.memory_space<vmem>>, %arg2: memref<128x128xf32, #tpu.memory_space<vmem>>, %arg3: memref<1x128xf32, #tpu.memory_space<vmem>>, %arg4: memref<128x128xf32, #tpu.memory_space<vmem>>, %arg5: memref<1x128xf32, #tpu.memory_space<vmem>>, %arg6: memref<128x128xf32, #tpu.memory_space<vmem>>, %arg7: memref<1x128xf32, #tpu.memory_space<vmem>>, %arg8: memref<16x128xf32, #tpu.memory_space<vmem>>) attributes {dimension_semantics = [#tpu.dimension_semantics<parallel>], iteration_bounds = array<i64: 1>, scalar_prefetch = 0 : i64, scratch_operands = 0 : i64, tpu.core_type = #tpu.core_type<tc>, window_params = [{transform_indices = @transform_0, window_bounds = array<i64: 16, 128>}, {pipeline_mode = #tpu.pipeline_mode<synchronous>, transform_indices = @transform_1, window_bounds = array<i64: 128, 128>}, {pipeline_mode = #tpu.pipeline_mode<synchronous>, transform_indices = @transform_2, window_bounds = array<i64: 1, 128>}, {pipeline_mode = #tpu.pipeline_mode<synchronous>, transform_indices = @transform_3, window_bounds = array<i64: 128, 128>}, {pipeline_mode = #tpu.pipeline_mode<synchronous>, transform_indices = @transform_4, window_bounds = array<i64: 1, 128>}, {pipeline_mode = #tpu.pipeline_mode<synchronous>, transform_indices = @transform_5, window_bounds = array<i64: 128, 128>}, {pipeline_mode = #tpu.pipeline_mode<synchronous>, transform_indices = @transform_6, window_bounds = array<i64: 1, 128>}, {transform_indices = @transform_7, window_bounds = array<i64: 16, 128>}]} {
    %c0 = arith.constant 0 : index
    %c0_0 = arith.constant 0 : index
    %0 = vector.load %arg1[%c0, %c0_0] : memref<16x128xf32, #tpu.memory_space<vmem>>, vector<16x128xf32>
    %c0_1 = arith.constant 0 : index
    %c0_2 = arith.constant 0 : index
    %1 = vector.load %arg2[%c0_1, %c0_2] : memref<128x128xf32, #tpu.memory_space<vmem>>, vector<128x128xf32>
    %cst = arith.constant dense<0.000000e+00> : vector<16x128xf32>
    %2 = tpu.matmul %0, %1, %cst {dimension_numbers = #tpu.dot_dimension_numbers<[1], [0], [0], [1], [0, 0, 1, 1], [], []>} : vector<16x128xf32>, vector<128x128xf32>, vector<16x128xf32> -> vector<16x128xf32>
    %c0_3 = arith.constant 0 : index
    %c0_4 = arith.constant 0 : index
    %3 = vector.load %arg3[%c0_3, %c0_4] : memref<1x128xf32, #tpu.memory_space<vmem>>, vector<1x128xf32>
    %4 = vector.broadcast %3 : vector<1x128xf32> to vector<16x128xf32>
    %5 = arith.addf %2, %4 : vector<16x128xf32>
    %cst_5 = arith.constant 0.000000e+00 : f32
    %6 = vector.broadcast %cst_5 : f32 to vector<16x128xf32>
    %7 = arith.maximumf %5, %6 : vector<16x128xf32>
    %c0_6 = arith.constant 0 : index
    %c0_7 = arith.constant 0 : index
    %8 = vector.load %arg4[%c0_6, %c0_7] : memref<128x128xf32, #tpu.memory_space<vmem>>, vector<128x128xf32>
    %cst_8 = arith.constant dense<0.000000e+00> : vector<16x128xf32>
    %9 = tpu.matmul %7, %8, %cst_8 {dimension_numbers = #tpu.dot_dimension_numbers<[1], [0], [0], [1], [0, 0, 1, 1], [], []>} : vector<16x128xf32>, vector<128x128xf32>, vector<16x128xf32> -> vector<16x128xf32>
    %c0_9 = arith.constant 0 : index
    %c0_10 = arith.constant 0 : index
    %10 = vector.load %arg5[%c0_9, %c0_10] : memref<1x128xf32, #tpu.memory_space<vmem>>, vector<1x128xf32>
    %11 = vector.broadcast %10 : vector<1x128xf32> to vector<16x128xf32>
    %12 = arith.addf %9, %11 : vector<16x128xf32>
    %cst_11 = arith.constant 0.000000e+00 : f32
    %13 = vector.broadcast %cst_11 : f32 to vector<16x128xf32>
    %14 = arith.maximumf %12, %13 : vector<16x128xf32>
    %c0_12 = arith.constant 0 : index
    %c0_13 = arith.constant 0 : index
    %15 = vector.load %arg6[%c0_12, %c0_13] : memref<128x128xf32, #tpu.memory_space<vmem>>, vector<128x128xf32>
    %cst_14 = arith.constant dense<0.000000e+00> : vector<16x128xf32>
    %16 = tpu.matmul %14, %15, %cst_14 {dimension_numbers = #tpu.dot_dimension_numbers<[1], [0], [0], [1], [0, 0, 1, 1], [], []>} : vector<16x128xf32>, vector<128x128xf32>, vector<16x128xf32> -> vector<16x128xf32>
    %c0_15 = arith.constant 0 : index
    %c0_16 = arith.constant 0 : index
    %17 = vector.load %arg7[%c0_15, %c0_16] : memref<1x128xf32, #tpu.memory_space<vmem>>, vector<1x128xf32>
    %18 = vector.broadcast %17 : vector<1x128xf32> to vector<16x128xf32>
    %19 = arith.addf %16, %18 : vector<16x128xf32>
    %c0_17 = arith.constant 0 : index
    %c0_18 = arith.constant 0 : index
    %20 = vector.load %arg8[%c0_17, %c0_18] : memref<16x128xf32, #tpu.memory_space<vmem>>, vector<16x128xf32>
    tpu.vector_store %arg8[%c0_17, %c0_18], %19 {strides = array<i32>} : memref<16x128xf32, #tpu.memory_space<vmem>>, vector<16x128xf32>,
    return
  }
  func.func @transform_0(%arg0: i32) -> (i32, i32) {
    %c0_i32 = arith.constant 0 : i32
    %c0_i32_0 = arith.constant 0 : i32
    return %arg0, %c0_i32 : i32, i32
  }
  func.func @transform_1(%arg0: i32) -> (i32, i32) {
    %c0_i32 = arith.constant 0 : i32
    %c0_i32_0 = arith.constant 0 : i32
    %c0_i32_1 = arith.constant 0 : i32
    return %c0_i32, %c0_i32_0 : i32, i32
  }
  func.func @transform_2(%arg0: i32) -> (i32, i32) {
    %c0_i32 = arith.constant 0 : i32
    %c0_i32_0 = arith.constant 0 : i32
    %c0_i32_1 = arith.constant 0 : i32
    return %c0_i32, %c0_i32_0 : i32, i32
  }
  func.func @transform_3(%arg0: i32) -> (i32, i32) {
    %c0_i32 = arith.constant 0 : i32
    %c0_i32_0 = arith.constant 0 : i32
    %c0_i32_1 = arith.constant 0 : i32
    return %c0_i32, %c0_i32_0 : i32, i32
  }
  func.func @transform_4(%arg0: i32) -> (i32, i32) {
    %c0_i32 = arith.constant 0 : i32
    %c0_i32_0 = arith.constant 0 : i32
    %c0_i32_1 = arith.constant 0 : i32
    return %c0_i32, %c0_i32_0 : i32, i32
  }
  func.func @transform_5(%arg0: i32) -> (i32, i32) {
    %c0_i32 = arith.constant 0 : i32
    %c0_i32_0 = arith.constant 0 : i32
    %c0_i32_1 = arith.constant 0 : i32
    return %c0_i32, %c0_i32_0 : i32, i32
  }
  func.func @transform_6(%arg0: i32) -> (i32, i32) {
    %c0_i32 = arith.constant 0 : i32
    %c0_i32_0 = arith.constant 0 : i32
    %c0_i32_1 = arith.constant 0 : i32
    return %c0_i32, %c0_i32_0 : i32, i32
  }
  func.func @transform_7(%arg0: i32) -> (i32, i32) {
    %c0_i32 = arith.constant 0 : i32
    %c0_i32_0 = arith.constant 0 : i32
    return %arg0, %c0_i32 : i32, i32
  }
}

</mosaic_0001>

<llo_original>
// kernel: nn_forward.1
$region0: #{nn_forward.1}
  #allocation0 [shape = 'u32[]', space=smem, size = 0x4, offset = 0x4, fixed_abs, tag = 'smem constant byte address 0x4 - core index']
  #allocation1 [shape = 'u32[72,128]{1,0:T(1,128)}', space=vmem, size = 0x9000, scoped, tag = 'internal scratch']
  %s0 = inlined_call_operand.vmem [shape: f32[16,128], index: 0, kind: input, shape index: {}]
  %s1 = inlined_call_operand.vmem [shape: f32[128,128], index: 1, kind: input, shape index: {}]
  %s2 = inlined_call_operand.vmem [shape: f32[1,128], index: 2, kind: input, shape index: {}]
  %s3 = inlined_call_operand.vmem [shape: f32[128,128], index: 3, kind: input, shape index: {}]
  %s4 = inlined_call_operand.vmem [shape: f32[1,128], index: 4, kind: input, shape index: {}]
  %s5 = inlined_call_operand.vmem [shape: f32[128,128], index: 5, kind: input, shape index: {}]
  %s6 = inlined_call_operand.vmem [shape: f32[1,128], index: 6, kind: input, shape index: {}]
  %s7 = inlined_call_operand.vmem [shape: f32[16,128], index: 7, kind: output, shape index: {}]
  %s8 = sld [smem:[#allocation0]]
  $region38: #{nn_forward.1} parent=0
    _
  %s10 = ssub.s32 1, %s8
  %s11 = scalar_select 0, %s10, %s8
  // Predicated region
  $region2: #{nn_forward.1} parent=0 // pred_check
    _
  $region3: #{nn_forward.1} parent=0 // pred_check_branch
    %13 = sbr.rel (0) target = $region5
  $region4: #{nn_forward.1} parent=0 // pred_region
    _
  $region5: #{nn_forward.1} parent=0 // pred_fallthru
    _
  // Predicated region
  $region6: #{nn_forward.1} parent=0 // pred_check
    _
  $region7: #{nn_forward.1} parent=0 // pred_check_branch
    %15 = sbr.rel (0) target = $region9
  $region8: #{nn_forward.1} parent=0 // pred_region
    _
  $region9: #{nn_forward.1} parent=0 // pred_fallthru
    _
  // Predicated region
  $region10: #{nn_forward.1} parent=0 // pred_check
    _
  $region11: #{nn_forward.1} parent=0 // pred_check_branch
    %17 = sbr.rel (0) target = $region13
  $region12: #{nn_forward.1} parent=0 // pred_region
    _
  $region13: #{nn_forward.1} parent=0 // pred_fallthru
    _
  // Predicated region
  $region14: #{nn_forward.1} parent=0 // pred_check
    _
  $region15: #{nn_forward.1} parent=0 // pred_check_branch
    %19 = sbr.rel (0) target = $region17
  $region16: #{nn_forward.1} parent=0 // pred_region
    _
  $region17: #{nn_forward.1} parent=0 // pred_fallthru
    _
  // Predicated region
  $region18: #{nn_forward.1} parent=0 // pred_check
    _
  $region19: #{nn_forward.1} parent=0 // pred_check_branch
    %21 = sbr.rel (0) target = $region21
  $region20: #{nn_forward.1} parent=0 // pred_region
    _
  $region21: #{nn_forward.1} parent=0 // pred_fallthru
    _
  // Predicated region
  $region22: #{nn_forward.1} parent=0 // pred_check
    _
  $region23: #{nn_forward.1} parent=0 // pred_check_branch
    %23 = sbr.rel (0) target = $region25
  $region24: #{nn_forward.1} parent=0 // pred_region
    _
  $region25: #{nn_forward.1} parent=0 // pred_fallthru
    _
  // Predicated region
  $region26: #{nn_forward.1} parent=0 // pred_check
    _
  $region27: #{nn_forward.1} parent=0 // pred_check_branch
    %25 = sbr.rel (0) target = $region29
  $region28: #{nn_forward.1} parent=0 // pred_region
    _
  $region29: #{nn_forward.1} parent=0 // pred_fallthru
    _
  %v26 = vld [vmem:[%s0] sm:$0xff]
  %v27 = vld [vmem:[%s0 + $0x8] sm:$0xff]
  %v28 = vld [vmem:[%s1] sm:$0xff]
  %v29 = vld [vmem:[%s1 + $0x8] sm:$0xff]
  %v30 = vld [vmem:[%s1 + $0x10] sm:$0xff]
  %v31 = vld [vmem:[%s1 + $0x18] sm:$0xff]
  %v32 = vld [vmem:[%s1 + $0x20] sm:$0xff]
  %v33 = vld [vmem:[%s1 + $0x28] sm:$0xff]
  %v34 = vld [vmem:[%s1 + $0x30] sm:$0xff]
  %v35 = vld [vmem:[%s1 + $0x38] sm:$0xff]
  %v36 = vld [vmem:[%s1 + $0x40] sm:$0xff]
  %v37 = vld [vmem:[%s1 + $0x48] sm:$0xff]
  %v38 = vld [vmem:[%s1 + $0x50] sm:$0xff]
  %v39 = vld [vmem:[%s1 + $0x58] sm:$0xff]
  %v40 = vld [vmem:[%s1 + $0x60] sm:$0xff]
  %v41 = vld [vmem:[%s1 + $0x68] sm:$0xff]
  %v42 = vld [vmem:[%s1 + $0x70] sm:$0xff]
  %v43 = vld [vmem:[%s1 + $0x78] sm:$0xff]
  %v44 = vld [vmem:[%s2] sm:$0x1]
  %v46 = vperm.slane %v44, 0
  %48 = vmatpush.msra.mxu0 %v43
  %49 = vmatpush.msra.mxu0 %v42
  %50 = vmatpush.msra.mxu0 %v41
  %51 = vmatpush.msra.mxu0 %v40
  %52 = vmatpush.msra.mxu0 %v39
  %53 = vmatpush.msra.mxu0 %v38
  %54 = vmatpush.msra.mxu0 %v37
  %55 = vmatpush.msra.mxu0 %v36
  %56 = vmatpush.msra.mxu0 %v35
  %57 = vmatpush.msra.mxu0 %v34
  %58 = vmatpush.msra.mxu0 %v33
  %59 = vmatpush.msra.mxu0 %v32
  %60 = vmatpush.msra.mxu0 %v31
  %61 = vmatpush.msra.mxu0 %v30
  %62 = vmatpush.msra.mxu0 %v29
  %63 = vmatpush.msra.mxu0 %v28
  %64 = vmatmul.f32.gmra.mxu0 %v26
  %v65 = vpop.f32.mrf.mxu0
  %v66 = vadd.f32 %v46, %v65
  %67 = vmatmul.f32.gmra.mxu0 %v27
  %v68 = vpop.f32.mrf.mxu0
  %v69 = vadd.f32 %v46, %v68
  %70 = vdwg.mxu0
  %v71 = vmax.f32 %v66, 0.0
  %v72 = vmax.f32 %v69, 0.0
  %v73 = vld [vmem:[%s3] sm:$0xff]
  %v74 = vld [vmem:[%s3 + $0x8] sm:$0xff]
  %v75 = vld [vmem:[%s3 + $0x10] sm:$0xff]
  %v76 = vld [vmem:[%s3 + $0x18] sm:$0xff]
  %v77 = vld [vmem:[%s3 + $0x20] sm:$0xff]
  %v78 = vld [vmem:[%s3 + $0x28] sm:$0xff]
  %v79 = vld [vmem:[%s3 + $0x30] sm:$0xff]
  %v80 = vld [vmem:[%s3 + $0x38] sm:$0xff]
  %v81 = vld [vmem:[%s3 + $0x40] sm:$0xff]
  %v82 = vld [vmem:[%s3 + $0x48] sm:$0xff]
  %v83 = vld [vmem:[%s3 + $0x50] sm:$0xff]
  %v84 = vld [vmem:[%s3 + $0x58] sm:$0xff]
  %v85 = vld [vmem:[%s3 + $0x60] sm:$0xff]
  %v86 = vld [vmem:[%s3 + $0x68] sm:$0xff]
  %v87 = vld [vmem:[%s3 + $0x70] sm:$0xff]
  %v88 = vld [vmem:[%s3 + $0x78] sm:$0xff]
  %v89 = vld [vmem:[%s4] sm:$0x1]
  %v91 = vperm.slane %v89, 0
  %93 = vmatpush.msra.mxu0 %v88
  %94 = vmatpush.msra.mxu0 %v87
  %95 = vmatpush.msra.mxu0 %v86
  %96 = vmatpush.msra.mxu0 %v85
  %97 = vmatpush.msra.mxu0 %v84
  %98 = vmatpush.msra.mxu0 %v83
  %99 = vmatpush.msra.mxu0 %v82
  %100 = vmatpush.msra.mxu0 %v81
  %101 = vmatpush.msra.mxu0 %v80
  %102 = vmatpush.msra.mxu0 %v79
  %103 = vmatpush.msra.mxu0 %v78
  %104 = vmatpush.msra.mxu0 %v77
  %105 = vmatpush.msra.mxu0 %v76
  %106 = vmatpush.msra.mxu0 %v75
  %107 = vmatpush.msra.mxu0 %v74
  %108 = vmatpush.msra.mxu0 %v73
  %109 = vmatmul.f32.gmra.mxu0 %v71
  %v110 = vpop.f32.mrf.mxu0
  %v111 = vadd.f32 %v91, %v110
  %112 = vmatmul.f32.gmra.mxu0 %v72
  %v113 = vpop.f32.mrf.mxu0
  %v114 = vadd.f32 %v91, %v113
  %115 = vdwg.mxu0
  %v116 = vmax.f32 %v111, 0.0
  %v117 = vmax.f32 %v114, 0.0
  %v118 = vld [vmem:[%s5] sm:$0xff]
  %v119 = vld [vmem:[%s5 + $0x8] sm:$0xff]
  %v120 = vld [vmem:[%s5 + $0x10] sm:$0xff]
  %v121 = vld [vmem:[%s5 + $0x18] sm:$0xff]
  %v122 = vld [vmem:[%s5 + $0x20] sm:$0xff]
  %v123 = vld [vmem:[%s5 + $0x28] sm:$0xff]
  %v124 = vld [vmem:[%s5 + $0x30] sm:$0xff]
  %v125 = vld [vmem:[%s5 + $0x38] sm:$0xff]
  %v126 = vld [vmem:[%s5 + $0x40] sm:$0xff]
  %v127 = vld [vmem:[%s5 + $0x48] sm:$0xff]
  %v128 = vld [vmem:[%s5 + $0x50] sm:$0xff]
  %v129 = vld [vmem:[%s5 + $0x58] sm:$0xff]
  %v130 = vld [vmem:[%s5 + $0x60] sm:$0xff]
  %v131 = vld [vmem:[%s5 + $0x68] sm:$0xff]
  %v132 = vld [vmem:[%s5 + $0x70] sm:$0xff]
  %v133 = vld [vmem:[%s5 + $0x78] sm:$0xff]
  %v134 = vld [vmem:[%s6] sm:$0x1]
  %v136 = vperm.slane %v134, 0
  %138 = vmatpush.msra.mxu0 %v133
  %139 = vmatpush.msra.mxu0 %v132
  %140 = vmatpush.msra.mxu0 %v131
  %141 = vmatpush.msra.mxu0 %v130
  %142 = vmatpush.msra.mxu0 %v129
  %143 = vmatpush.msra.mxu0 %v128
  %144 = vmatpush.msra.mxu0 %v127
  %145 = vmatpush.msra.mxu0 %v126
  %146 = vmatpush.msra.mxu0 %v125
  %147 = vmatpush.msra.mxu0 %v124
  %148 = vmatpush.msra.mxu0 %v123
  %149 = vmatpush.msra.mxu0 %v122
  %150 = vmatpush.msra.mxu0 %v121
  %151 = vmatpush.msra.mxu0 %v120
  %152 = vmatpush.msra.mxu0 %v119
  %153 = vmatpush.msra.mxu0 %v118
  %154 = vmatmul.f32.gmra.mxu0 %v116
  %v155 = vpop.f32.mrf.mxu0
  %v156 = vadd.f32 %v136, %v155
  %157 = vmatmul.f32.gmra.mxu0 %v117
  %v158 = vpop.f32.mrf.mxu0
  %v159 = vadd.f32 %v136, %v158
  %160 = vdwg.mxu0
  %161 = vst [vmem:[%s7] sm:$0xff] %v156
  %162 = vst [vmem:[%s7 + $0x8] sm:$0xff] %v159
  // Predicated region
  $region30: #{nn_forward.1} parent=0 // pred_check
    _
  $region31: #{nn_forward.1} parent=0 // pred_check_branch
    %164 = sbr.rel (0) target = $region33
  $region32: #{nn_forward.1} parent=0 // pred_region
    _
  $region33: #{nn_forward.1} parent=0 // pred_fallthru
    _
  // Predicated region
  $region34: #{nn_forward.1} parent=0 // pred_check
    _
  $region35: #{nn_forward.1} parent=0 // pred_check_branch
    %166 = sbr.rel (0) target = $region37
  $region36: #{nn_forward.1} parent=0 // pred_region
    _
  $region37: #{nn_forward.1} parent=0 // pred_fallthru
    _

</llo_original>
